<compile_context>
chip_gen: v7x
topology: tpu7x:2x2x1
jax: 0.10.0
libtpu: 0.0.40
codegen_flags: <defaults>
</compile_context>

<pallas_src>
import functools
import math

import jax
import jax.numpy as jnp
from jax import lax
from jax.experimental import pallas as pl
from jax.experimental.pallas import tpu as pltpu


# ------------------------------------------------------------------
# helpers
# ------------------------------------------------------------------
def _tile(dim, target, align, min_align=None):
    """Largest tile <= target that divides `dim` and is a multiple of `align`
    (retrying with smaller alignments down to `min_align`); falls back to the
    full dimension, which is always a legal TPU block shape."""
    if dim <= target:
        return dim
    if min_align is None:
        min_align = align
    a = align
    while a >= min_align:
        t = (target // a) * a
        while t >= a:
            if dim % t == 0:
                return t
            t -= a
        a //= 2
    return dim


# ------------------------------------------------------------------
# Tiled matmul: (M, K) @ (K, N) -> (M, N), f32 accumulation in VMEM scratch.
# Used once for the fused QKV projection.
# ------------------------------------------------------------------
def _matmul_kernel(x_ref, w_ref, o_ref, acc_ref):
    @pl.when(pl.program_id(2) == 0)
    def _():
        acc_ref[...] = jnp.zeros_like(acc_ref)

    acc_ref[...] += jnp.dot(x_ref[...], w_ref[...],
                            preferred_element_type=jnp.float32)

    @pl.when(pl.program_id(2) == pl.num_programs(2) - 1)
    def _():
        o_ref[...] = acc_ref[...].astype(o_ref.dtype)


def pallas_matmul(x, w, *, out_dtype=jnp.float32, tm=512, tn=1024, tk=512):
    M, K = x.shape
    K2, N = w.shape
    assert K == K2
    # v7x-safe tiling (<~12 MiB VMEM with double buffering); v6e could go bigger.
    tm = _tile(M, tm, 16, 8)
    tn = _tile(N, tn, 128)
    tk = _tile(K, tk, 128)
    grid = (M // tm, N // tn, K // tk)
    return pl.pallas_call(
        _matmul_kernel,
        out_shape=jax.ShapeDtypeStruct((M, N), out_dtype),
        grid_spec=pltpu.PrefetchScalarGridSpec(
            num_scalar_prefetch=0,
            grid=grid,
            in_specs=[
                pl.BlockSpec((tm, tk), lambda i, j, k: (i, k)),
                pl.BlockSpec((tk, tn), lambda i, j, k: (k, j)),
            ],
            out_specs=pl.BlockSpec((tm, tn), lambda i, j, k: (i, j)),
            scratch_shapes=[pltpu.VMEM((tm, tn), jnp.float32)],
        ),
        compiler_params=pltpu.CompilerParams(
            dimension_semantics=("parallel", "parallel", "arbitrary")),
    )(x, w)


# ------------------------------------------------------------------
# Output projection as a reduction over heads:
#   out[b, n, :] = sum_h O[b, h, n, :] @ W_r[h]          (no transpose of O)
# ------------------------------------------------------------------
def _out_proj_kernel(o_ref, w_ref, out_ref, acc_ref):
    @pl.when(pl.program_id(3) == 0)
    def _():
        acc_ref[...] = jnp.zeros_like(acc_ref)

    acc_ref[...] += jnp.dot(o_ref[0, 0], w_ref[0],
                            preferred_element_type=jnp.float32)

    @pl.when(pl.program_id(3) == pl.num_programs(3) - 1)
    def _():
        out_ref[0] = acc_ref[...].astype(out_ref.dtype)


def pallas_out_proj(O, W_r, *, out_dtype=jnp.float32, tm=256, tn=512):
    B, H, N, two_dh = O.shape
    _, _, D = W_r.shape
    tm = _tile(N, tm, 16, 8)
    tn = _tile(D, tn, 128)
    grid = (B, N // tm, D // tn, H)
    return pl.pallas_call(
        _out_proj_kernel,
        out_shape=jax.ShapeDtypeStruct((B, N, D), out_dtype),
        grid_spec=pltpu.PrefetchScalarGridSpec(
            num_scalar_prefetch=0,
            grid=grid,
            in_specs=[
                pl.BlockSpec((1, 1, tm, two_dh), lambda b, i, j, h: (b, h, i, 0)),
                pl.BlockSpec((1, two_dh, tn), lambda b, i, j, h: (h, 0, j)),
            ],
            out_specs=pl.BlockSpec((1, tm, tn), lambda b, i, j, h: (b, i, j)),
            scratch_shapes=[pltpu.VMEM((tm, tn), jnp.float32)],
        ),
        compiler_params=pltpu.CompilerParams(
            dimension_semantics=("parallel", "parallel", "parallel", "arbitrary")),
    )(O, W_r)


# ------------------------------------------------------------------
# Flash-style differential attention kernel.
# Grid: (B, H, N//tq, N//tkv); kv axis innermost / "arbitrary".
# ------------------------------------------------------------------
def _diff_flash_kernel(lam_ref, q1_ref, q2_ref, k1_ref, k2_ref, v_ref, o_ref,
                       m1_ref, l1_ref, acc1_ref, m2_ref, l2_ref, acc2_ref,
                       *, tq, tkv, eps, approx_recip):
    h = pl.program_id(1)
    qi = pl.program_id(2)
    ki = pl.program_id(3)
    n_kv = pl.num_programs(3)

    @pl.when(ki == 0)
    def _init():
        m1_ref[...] = jnp.full_like(m1_ref, -jnp.inf)
        m2_ref[...] = jnp.full_like(m2_ref, -jnp.inf)
        l1_ref[...] = jnp.zeros_like(l1_ref)
        l2_ref[...] = jnp.zeros_like(l2_ref)
        acc1_ref[...] = jnp.zeros_like(acc1_ref)
        acc2_ref[...] = jnp.zeros_like(acc2_ref)

    q_start = qi * tq
    k_start = ki * tkv
    q_last = q_start + (tq - 1)
    k_last = k_start + (tkv - 1)

    def _process(masked):
        v = v_ref[0, 0]                                  # (tkv, 2*d_head)
        dn = (((1,), (1,)), ((), ()))                    # contract last dims

        def scores(q_r, k_r):
            s = lax.dot_general(q_r[0, 0], k_r[0, 0], dn,
                                preferred_element_type=jnp.float32)
            if masked:
                row = lax.broadcasted_iota(jnp.int32, (tq, tkv), 0) + q_start
                col = lax.broadcasted_iota(jnp.int32, (tq, tkv), 1) + k_start
                s = jnp.where(col <= row, s, -jnp.inf)
            return s

        def update(s, m_ref, l_ref, acc_ref):
            m_prev = m_ref[...]
            m_new = jnp.maximum(m_prev, jnp.max(s, axis=-1, keepdims=True))
            if masked:
                # Rows with no visible key yet keep m == -inf; use a finite
                # pivot so exp(-inf - (-inf)) can never produce NaN.
                m_piv = jnp.where(m_new == -jnp.inf, jnp.float32(0.0), m_new)
            else:
                m_piv = m_new
            alpha = jnp.exp(m_prev - m_piv)
            p = jnp.exp(s - m_piv)                       # f32 exp (EUP)
            l_ref[...] = alpha * l_ref[...] + jnp.sum(p, axis=-1, keepdims=True)
            acc_ref[...] = alpha * acc_ref[...] + jnp.dot(
                p.astype(v.dtype), v, preferred_element_type=jnp.float32)
            m_ref[...] = m_new

        # Interleave the two online softmaxes (halves live (tq,tkv) f32 tiles).
        update(scores(q1_ref, k1_ref), m1_ref, l1_ref, acc1_ref)
        update(scores(q2_ref, k2_ref), m2_ref, l2_ref, acc2_ref)

    # Causal block classification (scalar-only work):
    #   skipped : k_start >  q_last   -> no compute (KV DMA clamped in index_map)
    #   full    : k_last  <= q_start  -> no mask needed
    #   diagonal: otherwise           -> apply causal mask
    @pl.when(jnp.logical_and(k_start <= q_last, k_last <= q_start))
    def _full_block():
        _process(masked=False)

    @pl.when(jnp.logical_and(k_start <= q_last, k_last > q_start))
    def _diag_block():
        _process(masked=True)

    @pl.when(ki == n_kv - 1)
    def _finalize():
        lam = lam_ref[h]                                 # per-head lambda (SMEM)
        # Causality guarantees every row saw >= 1 key, so l1/l2 > 0.
        inv1 = pl.reciprocal(l1_ref[...], approx=approx_recip)
        inv2 = pl.reciprocal(l2_ref[...], approx=approx_recip)
        o = acc1_ref[...] * inv1 - lam * (acc2_ref[...] * inv2)
        ms = jnp.mean(o * o, axis=-1, keepdims=True)
        o = o * lax.rsqrt(ms + eps)                      # RMS norm
        o_ref[0, 0] = o.astype(o_ref.dtype)


def _diff_attention(Q1, Q2, K1, K2, V, lam, *, eps, tq, tkv, out_dtype,
                    approx_recip):
    B, H, N, d_head = Q1.shape
    two_dh = V.shape[-1]
    tq = _tile(N, tq, 16, 8)
    # Keep tkv a multiple of tq: KV block starts then align with Q blocks, so a
    # contributing block never contains fully-masked rows and skipping is exact.
    tkv = _tile(N, max(tkv, tq), tq)
    grid = (B, H, N // tq, N // tkv)

    kernel = functools.partial(_diff_flash_kernel, tq=tq, tkv=tkv, eps=eps,
                               approx_recip=approx_recip)

    def q_map(b, h, qi, ki):
        return (b, h, qi, 0)

    def kv_map(b, h, qi, ki):
        # Clamp to the last contributing KV block: skipped (fully-masked) steps
        # re-use the previous tile instead of issuing a useless DMA.
        last = (qi * tq + (tq - 1)) // tkv
        return (b, h, jnp.minimum(ki, last), 0)

    def o_map(b, h, qi, ki):
        return (b, h, qi, 0)

    itemsize = jnp.dtype(Q1.dtype).itemsize
    cost = pl.CostEstimate(
        flops=int(6 * B * H * N * N * d_head),
        transcendentals=int(B * H * N * N),
        bytes_accessed=int(B * H * N * (4 * d_head + 2 * two_dh) * itemsize),
    )

    return pl.pallas_call(
        kernel,
        out_shape=jax.ShapeDtypeStruct((B, H, N, two_dh), out_dtype),
        grid_spec=pltpu.PrefetchScalarGridSpec(
            num_scalar_prefetch=0,
            grid=grid,
            in_specs=[
                pl.BlockSpec(memory_space=pltpu.MemorySpace.SMEM),  # lam (H,)
                pl.BlockSpec((1, 1, tq, d_head), q_map),            # Q1
                pl.BlockSpec((1, 1, tq, d_head), q_map),            # Q2
                pl.BlockSpec((1, 1, tkv, d_head), kv_map),          # K1
                pl.BlockSpec((1, 1, tkv, d_head), kv_map),          # K2
                pl.BlockSpec((1, 1, tkv, two_dh), kv_map),          # V
            ],
            out_specs=pl.BlockSpec((1, 1, tq, two_dh), o_map),
            scratch_shapes=[
                pltpu.VMEM((tq, 1), jnp.float32),        # m1
                pltpu.VMEM((tq, 1), jnp.float32),        # l1
                pltpu.VMEM((tq, two_dh), jnp.float32),   # acc1
                pltpu.VMEM((tq, 1), jnp.float32),        # m2
                pltpu.VMEM((tq, 1), jnp.float32),        # l2
                pltpu.VMEM((tq, two_dh), jnp.float32),   # acc2
            ],
        ),
        compiler_params=pltpu.CompilerParams(
            dimension_semantics=("parallel", "parallel", "parallel", "arbitrary")),
        cost_estimate=cost,
    )(lam, Q1, Q2, K1, K2, V)


# ------------------------------------------------------------------
# Forward pass wrapper
# ------------------------------------------------------------------
def mhda_forward(X, params, *, num_heads, lambda_init, eps=1e-5,
                 compute_dtype=jnp.bfloat16, tq=256, tkv=512,
                 approx_recip=True):
    B, N, D = X.shape
    H = num_heads
    d_head = D // H
    two_dh = 2 * d_head
    cdt = compute_dtype

    # Fused QKV projection (one HBM pass over X); 1/sqrt(d_head) folded into W_q.
    scaling = 1.0 / math.sqrt(d_head)
    W_qkv = jnp.concatenate(
        [params["W_q"].T * scaling, params["W_k"].T, params["W_v"].T], axis=1)

    Xf = X.reshape(B * N, D).astype(cdt)
    QKV = pallas_matmul(Xf, W_qkv.astype(cdt), out_dtype=cdt)   # (B*N, 3*H*2dh)

    # Head split + Q1/Q2, K1/K2 split in XLA (single transpose pass).
    # TODO(synk): when two_dh % 128 == 0 this transpose can be folded into the
    # attention BlockSpecs (lane-offset head indexing) and removed entirely.
    R = QKV.reshape(B, N, 3, H, two_dh)
    Qh = R[:, :, 0].transpose(0, 2, 1, 3)                       # (B,H,N,2dh), pre-scaled
    Kh = R[:, :, 1].transpose(0, 2, 1, 3)
    Vh = R[:, :, 2].transpose(0, 2, 1, 3)
    Q1, Q2 = Qh[..., :d_head], Qh[..., d_head:]
    K1, K2 = Kh[..., :d_head], Kh[..., d_head:]

    lam = (jnp.exp(jnp.sum(params["lambda_q1"] * params["lambda_k1"], axis=-1))
           - jnp.exp(jnp.sum(params["lambda_q2"] * params["lambda_k2"], axis=-1))
           + lambda_init).astype(jnp.float32)                   # (H,)

    O = _diff_attention(Q1, Q2, K1, K2, Vh, lam, eps=eps, tq=tq, tkv=tkv,
                        out_dtype=cdt, approx_recip=approx_recip)  # (B,H,N,2dh)

    # Output projection as a reduction over heads (no transpose of O).
    # rms_scale * (1 - lambda_init) is folded into W_o.
    W_or = (params["W_o"].T.reshape(H, two_dh, D)
            * (params["rms_scale"] * (1.0 - lambda_init))[None, :, None])
    out = pallas_out_proj(O, W_or.astype(cdt), out_dtype=jnp.float32)
    return out                                                   # (B, N, D)


# ------------------------------------------------------------------
# Pure-JAX reference (mirrors the PyTorch forward) for verification
# ------------------------------------------------------------------
def reference_forward(X, params, *, num_heads, lambda_init, eps=1e-5):
    B, N, D = X.shape
    d_head = D // num_heads
    two_dh = 2 * d_head

    Q = X @ params["W_q"].T
    K = X @ params["W_k"].T
    V = X @ params["W_v"].T
    Q = Q.reshape(B, N, num_heads, two_dh).transpose(0, 2, 1, 3)
    K = K.reshape(B, N, num_heads, two_dh).transpose(0, 2, 1, 3)
    V = V.reshape(B, N, num_heads, two_dh).transpose(0, 2, 1, 3)
    Q1, Q2 = Q[..., :d_head], Q[..., d_head:]
    K1, K2 = K[..., :d_head], K[..., d_head:]

    lam = (jnp.exp(jnp.sum(params["lambda_q1"] * params["lambda_k1"], axis=-1))
           - jnp.exp(jnp.sum(params["lambda_q2"] * params["lambda_k2"], axis=-1))
           + lambda_init)
    lam = lam[None, :, None, None]

    mask = jnp.where(jnp.tril(jnp.ones((N, N))) == 0, -jnp.inf, 0.0)
    scaling = 1.0 / math.sqrt(d_head)
    A1 = jnp.einsum("bhqd,bhkd->bhqk", Q1, K1) * scaling + mask
    A2 = jnp.einsum("bhqd,bhkd->bhqk", Q2, K2) * scaling + mask
    att = jax.nn.softmax(A1, axis=-1) - lam * jax.nn.softmax(A2, axis=-1)
    O = jnp.einsum("bhqk,bhkd->bhqd", att, V)

    rms = jnp.sqrt(jnp.mean(O * O, axis=-1, keepdims=True) + eps)
    O = O / rms * params["rms_scale"]
    O = O * (1.0 - lambda_init)
    O = O.transpose(0, 2, 1, 3).reshape(B, N, num_heads * two_dh)
    return O @ params["W_o"].T


# ------------------------------------------------------------------
# Deterministic parameter init (mirrors __init__ shapes)
# ------------------------------------------------------------------
def init_params(key, d_model, num_heads):
    d_head = d_model // num_heads
    out_dim = 2 * d_head * num_heads
    ks = jax.random.split(key, 8)

    def xavier(k, shape):           # shape = (out_features, in_features)
        fan_out, fan_in = shape
        limit = math.sqrt(6.0 / (fan_in + fan_out))
        return jax.random.uniform(k, shape, jnp.float32, -limit, limit)

    return dict(
        W_q=xavier(ks[0], (out_dim, d_model)),
        W_k=xavier(ks[1], (out_dim, d_model)),
        W_v=xavier(ks[2], (out_dim, d_model)),
        W_o=xavier(ks[3], (d_model, out_dim)),
        lambda_q1=jax.random.normal(ks[4], (num_heads, d_head), jnp.float32),
        lambda_k1=jax.random.normal(ks[5], (num_heads, d_head), jnp.float32),
        lambda_q2=jax.random.normal(ks[6], (num_heads, d_head), jnp.float32),
        lambda_k2=jax.random.normal(ks[7], (num_heads, d_head), jnp.float32),
        rms_scale=jnp.ones((2 * d_head,), jnp.float32),
    )


if __name__ == "__main__":
    lambda_init = 0.8

    # --- small shape (module-scale) ---
    B, N, d_model, num_heads = 2, 8, 32, 4
    key = jax.random.PRNGKey(0)
    kx, kp = jax.random.split(key)
    X = jax.random.normal(kx, (B, N, d_model), jnp.float32)
    params = init_params(kp, d_model, num_heads)

    ref = reference_forward(X, params, num_heads=num_heads, lambda_init=lambda_init)

    out_f32 = mhda_forward(X, params, num_heads=num_heads, lambda_init=lambda_init,
                           compute_dtype=jnp.float32, approx_recip=False)
    out_f32 = jax.block_until_ready(out_f32)
    assert out_f32.shape == (B, N, d_model), out_f32.shape
    assert jnp.allclose(out_f32, ref, atol=3e-2, rtol=3e-2), float(
        jnp.max(jnp.abs(out_f32 - ref)))

    out_bf16 = mhda_forward(X, params, num_heads=num_heads, lambda_init=lambda_init,
                            compute_dtype=jnp.bfloat16)
    out_bf16 = jax.block_until_ready(out_bf16)
    assert out_bf16.shape == (B, N, d_model), out_bf16.shape
    assert jnp.allclose(out_bf16, ref, atol=6e-2, rtol=6e-2), float(
        jnp.max(jnp.abs(out_bf16 - ref)))

    # --- medium shape: exercises the real tiled flash path (block skipping,
    #     masked/unmasked branch split, multi-block online softmax, head-
    #     reduction output projection). ---
    B2, N2, D2, H2 = 2, 1024, 512, 8
    kx2, kp2 = jax.random.split(jax.random.PRNGKey(1))
    X2 = jax.random.normal(kx2, (B2, N2, D2), jnp.float32)
    params2 = init_params(kp2, D2, H2)
    ref2 = reference_forward(X2, params2, num_heads=H2, lambda_init=lambda_init)
    out2 = mhda_forward(X2, params2, num_heads=H2, lambda_init=lambda_init,
                        compute_dtype=jnp.bfloat16)
    out2 = jax.block_until_ready(out2)
    assert out2.shape == (B2, N2, D2), out2.shape
    assert jnp.allclose(out2, ref2, atol=1e-1, rtol=1e-1), float(
        jnp.max(jnp.abs(out2 - ref2)))

    print("KERNEL_OK")
</pallas_src>

<mosaic_0001>
module attributes {stable_mosaic.version = 11 : i64} {
  func.func @_matmul_kernel(%arg0: i32, %arg1: i32, %arg2: i32, %arg3: memref<16x32xf32, #tpu.memory_space<vmem>>, %arg4: memref<32x192xf32, #tpu.memory_space<vmem>>, %arg5: memref<16x192xf32, #tpu.memory_space<vmem>>, %arg6: memref<16x192xf32, #tpu.memory_space<vmem>>) attributes {dimension_semantics = [#tpu.dimension_semantics<parallel>, #tpu.dimension_semantics<parallel>, #tpu.dimension_semantics<arbitrary>], iteration_bounds = array<i64: 1, 1, 1>, scalar_prefetch = 0 : i64, scratch_operands = 1 : i64, tpu.core_type = #tpu.core_type<tc>, window_params = [{transform_indices = @transform_0, window_bounds = array<i64: 16, 32>}, {transform_indices = @transform_1, window_bounds = array<i64: 32, 192>}, {transform_indices = @transform_2, window_bounds = array<i64: 16, 192>}]} {
    %c0_i32 = arith.constant 0 : i32
    %0 = arith.cmpi eq, %arg2, %c0_i32 : i32
    %1 = arith.extui %0 : i1 to i32
    %c0_i32_0 = arith.constant 0 : i32
    %2 = arith.cmpi ne, %1, %c0_i32_0 : i32
    scf.if %2 {
      %cst_10 = arith.constant 0.000000e+00 : f32
      %12 = vector.broadcast %cst_10 : f32 to vector<16x192xf32>
      %c0_11 = arith.constant 0 : index
      %c0_12 = arith.constant 0 : index
      %13 = vector.load %arg6[%c0_11, %c0_12] : memref<16x192xf32, #tpu.memory_space<vmem>>, vector<16x192xf32>
      tpu.vector_store %arg6[%c0_11, %c0_12], %12 {strides = array<i32>} : memref<16x192xf32, #tpu.memory_space<vmem>>, vector<16x192xf32>,
    } else {
    }
    %c0 = arith.constant 0 : index
    %c0_1 = arith.constant 0 : index
    %3 = vector.load %arg6[%c0, %c0_1] : memref<16x192xf32, #tpu.memory_space<vmem>>, vector<16x192xf32>
    %c0_2 = arith.constant 0 : index
    %c0_3 = arith.constant 0 : index
    %4 = vector.load %arg3[%c0_2, %c0_3] : memref<16x32xf32, #tpu.memory_space<vmem>>, vector<16x32xf32>
    %c0_4 = arith.constant 0 : index
    %c0_5 = arith.constant 0 : index
    %5 = vector.load %arg4[%c0_4, %c0_5] : memref<32x192xf32, #tpu.memory_space<vmem>>, vector<32x192xf32>
    %cst = arith.constant dense<0.000000e+00> : vector<16x192xf32>
    %6 = tpu.matmul %4, %5, %cst {dimension_numbers = #tpu.dot_dimension_numbers<[1], [0], [0], [1], [0, 0, 1, 1], [], []>} : vector<16x32xf32>, vector<32x192xf32>, vector<16x192xf32> -> vector<16x192xf32>
    %7 = arith.addf %3, %6 : vector<16x192xf32>
    %c0_6 = arith.constant 0 : index
    %c0_7 = arith.constant 0 : index
    %8 = vector.load %arg6[%c0_6, %c0_7] : memref<16x192xf32, #tpu.memory_space<vmem>>, vector<16x192xf32>
    tpu.vector_store %arg6[%c0_6, %c0_7], %7 {strides = array<i32>} : memref<16x192xf32, #tpu.memory_space<vmem>>, vector<16x192xf32>,
    %c0_i32_8 = arith.constant 0 : i32
    %9 = arith.cmpi eq, %arg2, %c0_i32_8 : i32
    %10 = arith.extui %9 : i1 to i32
    %c0_i32_9 = arith.constant 0 : i32
    %11 = arith.cmpi ne, %10, %c0_i32_9 : i32
    scf.if %11 {
      %c0_10 = arith.constant 0 : index
      %c0_11 = arith.constant 0 : index
      %12 = vector.load %arg6[%c0_10, %c0_11] : memref<16x192xf32, #tpu.memory_space<vmem>>, vector<16x192xf32>
      %c0_12 = arith.constant 0 : index
      %c0_13 = arith.constant 0 : index
      %13 = vector.load %arg5[%c0_12, %c0_13] : memref<16x192xf32, #tpu.memory_space<vmem>>, vector<16x192xf32>
      tpu.vector_store %arg5[%c0_12, %c0_13], %12 {strides = array<i32>} : memref<16x192xf32, #tpu.memory_space<vmem>>, vector<16x192xf32>,
    } else {
    }
    return
  }
  func.func @transform_0(%arg0: i32, %arg1: i32, %arg2: i32) -> (i32, i32) {
    %c0_i32 = arith.constant 0 : i32
    return %arg0, %arg2 : i32, i32
  }
  func.func @transform_1(%arg0: i32, %arg1: i32, %arg2: i32) -> (i32, i32) {
    %c0_i32 = arith.constant 0 : i32
    return %arg2, %arg1 : i32, i32
  }
  func.func @transform_2(%arg0: i32, %arg1: i32, %arg2: i32) -> (i32, i32) {
    %c0_i32 = arith.constant 0 : i32
    return %arg0, %arg1 : i32, i32
  }
}

</mosaic_0001>

<llo_original>
// kernel: tpu_custom_call.1
$region0: #{tpu_custom_call.1}
  #allocation0 [shape = 'u32[]', space=smem, size = 0x4, offset = 0x4, fixed_abs, tag = 'smem constant byte address 0x4 - core index']
  #allocation1 [shape = 'u32[144,128]{1,0:T(1,128)}', space=vmem, size = 0x12000, scoped, tag = 'internal scratch']
  #allocation2 [shape = 'f32[16,192]{1,0:T(8,128)}', space=vmem, size = 0x4000, scoped, tag = 'scratch operand']
  %s0 = inlined_call_operand.hbm [shape: f32[16,32], index: 0, kind: input, shape index: {}]
  %s1 = inlined_call_operand.hbm [shape: f32[32,192], index: 1, kind: input, shape index: {}]
  %s2 = inlined_call_operand.hbm [shape: f32[16,192], index: 2, kind: output, shape index: {}]
  %s3 = sld [smem:[#allocation0]]
  $region34: #{tpu_custom_call.1} parent=0
    _
  %s5 = ssub.s32 1, %s3
  %s6 = scalar_select 0, %s5, %s3
  $region1: #{tpu_custom_call.1} parent=0
    #allocation3 [shape = 'u8[8192]{0}', space=vmem, size = 0x2000, scoped, tag = 'input window, operand 0, single buffered']
    #allocation4 [shape = 's32[1]{0}', space=sflag, size = 0x4, scoped, tag = 'scoped memory for tpu_custom_call.1']
    #allocation5 [shape = 's32[1]{0}', space=sflag, size = 0x4, scoped, tag = 'scoped memory for tpu_custom_call.1']
    #allocation6 [shape = 'u8[32768]{0}', space=vmem, size = 0x8000, scoped, tag = 'input window, operand 1, single buffered']
    #allocation7 [shape = 's32[1]{0}', space=sflag, size = 0x4, scoped, tag = 'scoped memory for tpu_custom_call.1']
    #allocation8 [shape = 'u8[16384]{0}', space=vmem, size = 0x4000, scoped, tag = 'output window, operand 0, single buffered']
    %7 = vsyncpa [#allocation4], 0
    %8 = vsyncpa [#allocation7], 0
    %9 = vsyncpa [#allocation5], 0
    // Predicated region
    $region2: #{tpu_custom_call.1} parent=1 // pred_check
      _
    $region3: #{tpu_custom_call.1} parent=1 // pred_check_branch
      %11 = sbr.rel (0) target = $region5
    $region4: #{tpu_custom_call.1} parent=1 // pred_region
      %s13 = ssub.s32 256, 256
      %14 = vsyncadd [#allocation4], %s13
      %s15 = sshll.u32 [#allocation3], 4
      %s16 = int_to_ptr.vmem [resolvable:$true] %s15
      %21 = dma.hbm_to_vmem [thread:$0]  %s0, 256, %s16, [#allocation4], 128, 128, 8
    $region5: #{tpu_custom_call.1} parent=1 // pred_fallthru
      _
    // Predicated region
    $region6: #{tpu_custom_call.1} parent=1 // pred_check
      _
    $region7: #{tpu_custom_call.1} parent=1 // pred_check_branch
      %23 = sbr.rel (0) target = $region9
    $region8: #{tpu_custom_call.1} parent=1 // pred_region
      %s25 = ssub.s32 1024, 1024
      %26 = vsyncadd [#allocation7], %s25
      %s27 = sshll.u32 [#allocation6], 4
      %s28 = int_to_ptr.vmem [resolvable:$true] %s27
      %33 = dma.hbm_to_vmem [thread:$0]  %s1, 1024, %s28, [#allocation7], 256, 256, 16
    $region9: #{tpu_custom_call.1} parent=1 // pred_fallthru
      _
    // Predicated region
    $region10: #{tpu_custom_call.1} parent=1 // pred_check
      _
    $region11: #{tpu_custom_call.1} parent=1 // pred_check_branch
      %35 = sbr.rel (0) target = $region13
    $region12: #{tpu_custom_call.1} parent=1 // pred_region
      %36 = dma.done [#allocation4], 256
    $region13: #{tpu_custom_call.1} parent=1 // pred_fallthru
      _
    // Predicated region
    $region14: #{tpu_custom_call.1} parent=1 // pred_check
      _
    $region15: #{tpu_custom_call.1} parent=1 // pred_check_branch
      %38 = sbr.rel (0) target = $region17
    $region16: #{tpu_custom_call.1} parent=1 // pred_region
      %39 = dma.done [#allocation7], 1024
    $region17: #{tpu_custom_call.1} parent=1 // pred_fallthru
      _
    %p40 = scmp.eq.s32.totalorder 0, 0
    // Predicated region
    $region18: #{tpu_custom_call.1} parent=1 // pred_check
      %p41 = pneg %p40
    $region19: #{tpu_custom_call.1} parent=1 // pred_check_branch
      %43 = sbr.rel (%p41) target = $region21
    $region20: #{tpu_custom_call.1} parent=1 // pred_region
      %44 = vst [vmem:[#allocation2] sm:$0xff] 0.0
      %vm45 = vcmask 523264
      %46 = vst.msk [vmem:[#allocation2 + $0x8] sm:$0xff] %vm45, 0.0
      %47 = vst [vmem:[#allocation2 + $0x10] sm:$0xff] 0.0
      %48 = vst.msk [vmem:[#allocation2 + $0x18] sm:$0xff] %vm45, 0.0
    $region21: #{tpu_custom_call.1} parent=1 // pred_fallthru
      _
    %v49 = vld [vmem:[#allocation2] sm:$0xff]
    %v50 = vld [vmem:[#allocation2 + $0x8] sm:$0xff]
    %v51 = vld [vmem:[#allocation2 + $0x10] sm:$0xff]
    %v52 = vld [vmem:[#allocation2 + $0x18] sm:$0xff]
    %v53 = vld [vmem:[#allocation3] sm:$0xff]
    %v54 = vld [vmem:[#allocation3 + $0x8] sm:$0xff]
    %v55 = vld [vmem:[#allocation6] sm:$0xff]
    %v56 = vld [vmem:[#allocation6 + $0x8] sm:$0xff]
    %v57 = vld [vmem:[#allocation6 + $0x10] sm:$0xff]
    %v58 = vld [vmem:[#allocation6 + $0x18] sm:$0xff]
    %v59 = vld [vmem:[#allocation6 + $0x20] sm:$0xff]
    %v60 = vld [vmem:[#allocation6 + $0x28] sm:$0xff]
    %v61 = vld [vmem:[#allocation6 + $0x30] sm:$0xff]
    %v62 = vld [vmem:[#allocation6 + $0x38] sm:$0xff]
    %vm63 = vcmask 261120
    %v65 = vsel %vm63, %v53, 0
    %v68 = vsel %vm63, %v54, 0
    %70 = vmatprep.subr.mxu0 %v56
    %71 = vmatpush1.msra.mxu0 %v55
    %72 = vmatprep.subr.mxu0 %v58
    %73 = vmatpush1.msra.mxu0 %v57
    %74 = vmatprep.subr.mxu0 %v60
    %75 = vmatpush1.msra.mxu0 %v59
    %76 = vmatprep.subr.mxu0 %v62
    %77 = vmatpush1.msra.mxu0 %v61
    %78 = vmatprep.subr.mxu0 0.0
    %79 = vmatpush1.msra.mxu0 0.0
    %80 = vmatprep.subr.mxu0 0.0
    %81 = vmatpush1.msra.mxu0 0.0
    %82 = vmatprep.subr.mxu0 0.0
    %83 = vmatpush1.msra.mxu0 0.0
    %84 = vmatprep.subr.mxu0 0.0
    %85 = vmatpush1.msra.mxu0 0.0
    %86 = vmatprep.subr.mxu0 0.0
    %87 = vmatpush1.msra.mxu0 0.0
    %88 = vmatprep.subr.mxu0 0.0
    %89 = vmatpush1.msra.mxu0 0.0
    %90 = vmatprep.subr.mxu0 0.0
    %91 = vmatpush1.msra.mxu0 0.0
    %92 = vmatprep.subr.mxu0 0.0
    %93 = vmatpush1.msra.mxu0 0.0
    %94 = vmatprep.subr.mxu0 0.0
    %95 = vmatpush1.msra.mxu0 0.0
    %96 = vmatprep.subr.mxu0 0.0
    %97 = vmatpush1.msra.mxu0 0.0
    %98 = vmatprep.subr.mxu0 0.0
    %99 = vmatpush1.msra.mxu0 0.0
    %100 = vmatprep.subr.mxu0 0.0
    %101 = vmatpush1.msra.mxu0 0.0
    %102 = vmatprep.subr.mxu0 0.0
    %103 = vmatpush1.msra.mxu0 0.0
    %104 = vmatprep.subr.mxu0 0.0
    %105 = vmatpush1.msra.mxu0 0.0
    %106 = vmatprep.subr.mxu0 0.0
    %107 = vmatpush1.msra.mxu0 0.0
    %108 = vmatprep.subr.mxu0 0.0
    %109 = vmatpush1.msra.mxu0 0.0
    %110 = vmatprep.subr.mxu0 0.0
    %111 = vmatpush1.msra.mxu0 0.0
    %112 = vmatprep.subr.mxu0 0.0
    %113 = vmatpush1.msra.mxu0 0.0
    %114 = vmatprep.subr.mxu0 0.0
    %115 = vmatpush1.msra.mxu0 0.0
    %116 = vmatprep.subr.mxu0 0.0
    %117 = vmatpush1.msra.mxu0 0.0
    %118 = vmatprep.subr.mxu0 0.0
    %119 = vmatpush1.msra.mxu0 0.0
    %120 = vmatprep.subr.mxu0 0.0
    %121 = vmatpush1.msra.mxu0 0.0
    %122 = vmatprep.subr.mxu0 0.0
    %123 = vmatpush1.msra.mxu0 0.0
    %124 = vmatprep.subr.mxu0 0.0
    %125 = vmatpush1.msra.mxu0 0.0
    %126 = vmatprep.subr.mxu0 0.0
    %127 = vmatpush1.msra.mxu0 0.0
    %128 = vmatprep.subr.mxu0 0.0
    %129 = vmatpush1.msra.mxu0 0.0
    %130 = vmatprep.subr.mxu0 0.0
    %131 = vmatpush1.msra.mxu0 0.0
    %132 = vmatprep.subr.mxu0 0.0
    %133 = vmatpush1.msra.mxu0 0.0
    %134 = vmatprep.mubr.f32.mxu0 0.0
    %135 = vmatmul.mubr.f32.gmra.mrb[0].mxu0 %v65
    %v136 = vpop.f32.mrb[0].mxu0
    %v137 = vadd.f32 0.0, %v136
    %v138 = vpop.f32.mrb[0].mxu0
    %v139 = vadd.f32 0.0, %v138
    %140 = vmatprep.mubr.f32.mxu0 0.0
    %141 = vmatmul.mubr.f32.gmra.mrb[0].mxu0 %v68
    %v142 = vpop.f32.mrb[0].mxu0
    %v143 = vadd.f32 0.0, %v142
    %v144 = vpop.f32.mrb[0].mxu0
    %v145 = vadd.f32 0.0, %v144
    %146 = vdwg.mxu0
    %v147 = vadd.f32 %v49, %v137
    %v148 = vadd.f32 %v50, %v139
    %v149 = vadd.f32 %v51, %v143
    %v150 = vadd.f32 %v52, %v145
    %151 = vst [vmem:[#allocation2] sm:$0xff] %v147
    %vm152 = vcmask 523264
    %153 = vst.msk [vmem:[#allocation2 + $0x8] sm:$0xff] %vm152, %v148
    %154 = vst [vmem:[#allocation2 + $0x10] sm:$0xff] %v149
    %155 = vst.msk [vmem:[#allocation2 + $0x18] sm:$0xff] %vm152, %v150
    // Predicated region
    $region22: #{tpu_custom_call.1} parent=1 // pred_check
      %p156 = pneg %p40
    $region23: #{tpu_custom_call.1} parent=1 // pred_check_branch
      %158 = sbr.rel (%p156) target = $region25
    $region24: #{tpu_custom_call.1} parent=1 // pred_region
      %v159 = vld [vmem:[#allocation2] sm:$0xff]
      %v160 = vld [vmem:[#allocation2 + $0x8] sm:$0xff]
      %v161 = vld [vmem:[#allocation2 + $0x10] sm:$0xff]
      %v162 = vld [vmem:[#allocation2 + $0x18] sm:$0xff]
      %163 = vst [vmem:[#allocation8] sm:$0xff] %v159
      %164 = vst.msk [vmem:[#allocation8 + $0x8] sm:$0xff] %vm152, %v160
      %165 = vst [vmem:[#allocation8 + $0x10] sm:$0xff] %v161
      %166 = vst.msk [vmem:[#allocation8 + $0x18] sm:$0xff] %vm152, %v162
    $region25: #{tpu_custom_call.1} parent=1 // pred_fallthru
      _
    // Predicated region
    $region26: #{tpu_custom_call.1} parent=1 // pred_check
      _
    $region27: #{tpu_custom_call.1} parent=1 // pred_check_branch
      %168 = sbr.rel (0) target = $region29
    $region28: #{tpu_custom_call.1} parent=1 // pred_region
      %s170 = ssub.s32 512, 512
      %171 = vsyncadd [#allocation5], %s170
      %s172 = sshll.u32 [#allocation8], 4
      %s173 = int_to_ptr.vmem [resolvable:$true] %s172
      %178 = dma.vmem_to_hbm [thread:$0]  %s173, 512, %s2, [#allocation5], 256, 256, 16
    $region29: #{tpu_custom_call.1} parent=1 // pred_fallthru
      _
    // Predicated region
    $region30: #{tpu_custom_call.1} parent=1 // pred_check
      _
    $region31: #{tpu_custom_call.1} parent=1 // pred_check_branch
      %180 = sbr.rel (0) target = $region33
    $region32: #{tpu_custom_call.1} parent=1 // pred_region
      %181 = dma.done [#allocation5], 512
    $region33: #{tpu_custom_call.1} parent=1 // pred_fallthru
      _
    %182 = vsyncpa [#allocation4], 1
    %183 = vsyncpa [#allocation7], 1
    %184 = vsyncpa [#allocation5], 1

</llo_original>
